<compile_context>
chip_gen: v7x
topology: tpu7x:2x2x1
jax: 0.10.0
libtpu: 0.0.40
codegen_flags: <defaults>
</compile_context>

<pallas_src>
import jax
import jax.numpy as jnp
import numpy as np
from jax import lax
from jax.experimental import pallas as pl
from jax.experimental.pallas import tpu as pltpu

# ---------------- model hyper-parameters (small, consistent with the module) --
USER_NUM = 10
ITEM_NUM = 20
FACTOR_NUM = 32                       # factor_num
CONTEXT_DIMS = [12, 30]               # context_dims
FIELD_NUM = len(CONTEXT_DIMS)         # 2
CONTEXT_NUM = int(sum(CONTEXT_DIMS))  # 42
OFFSETS = [0] + CONTEXT_DIMS[:-1]     # [0, 12]
TOTAL_EMBED_NUM = FACTOR_NUM * FIELD_NUM
BATCH = 8
D_ONEHOT = CONTEXT_DIMS[0]            # 12  (first field: single categorical id)
D_MULTIHOT = CONTEXT_DIMS[1]          # 30  (second field: multi-hot 0/1 vector)

# ---------------- fused hot-matrix / weight-slab layout -----------------------
# hot-matrix column blocks (K axis): [user 1-hot | item 1-hot | ctx 1-hot | ctx multi-hot]
K_HOT = USER_NUM + ITEM_NUM + D_ONEHOT + D_MULTIHOT    # 72 (multiple of 8)
_K_ITEM = USER_NUM                                     # 10
_K_CTX1 = USER_NUM + ITEM_NUM                          # 30
_K_CTXM = USER_NUM + ITEM_NUM + D_ONEHOT               # 42

# weight-slab / feature column blocks (N axis):
F = FACTOR_NUM
_C_UEMB = 0                 # user embedding           (F)
_C_UCTX0 = F                # user ctx embedding, f0   (F)
_C_UCTX1 = 2 * F            # user ctx embedding, f1   (F)
_C_IEMB = 3 * F             # item embedding           (F)
_C_IBIAS = 4 * F            # item bias                (1)
_C_F0 = 4 * F + 1           # ctx field-0 embedding    (F)
_C_F1 = 5 * F + 1           # ctx field-1 embedding    (F)
_C_CBIAS = 6 * F + 1        # ctx bias                 (1)
N_FEAT = 6 * F + 2          # 194


# ------------------------------ Pallas kernel --------------------------------
def _cbpr_kernel(ids_ref, mh_ref, w_ref, out_ref):
    """ids_ref:  (2B, 3)   int32  [user_id, item_id, ctx_first_id]
       mh_ref:   (2B, 72)  f32    multi-hot values already placed at cols 42:72
       w_ref:    (72, 194) f32    fused weight slab (see layout above)
       out_ref:  (2B, 1)   f32    rows 0:B -> prediction_i, rows B:2B -> prediction_j
    """
    two_b = ids_ref.shape[0]

    ids = ids_ref[...]
    user_id = ids[:, 0:1]
    item_id = ids[:, 1:2]
    ctx_id = ids[:, 2:3]

    # Build the fused one-hot part of the hot matrix: disjoint column ranges
    # [0:10) user, [10:30) item, [30:42) ctx-field-0.  Multi-hot (cols 42:72)
    # arrives pre-placed in mh_ref, so a plain add completes the hot matrix.
    col = lax.broadcasted_iota(jnp.int32, (two_b, K_HOT), 1)
    onehots = ((col == user_id)
               | (col == item_id + _K_ITEM)
               | (col == ctx_id + _K_CTX1)).astype(jnp.float32)
    hot = onehots + mh_ref[...]                                       # (2B, 72)

    # Single MXU pass: every gather + every embedding matmul at once.
    feats = jnp.dot(hot, w_ref[...], preferred_element_type=jnp.float32)  # (2B, 194)

    user_emb = feats[:, _C_UEMB:_C_UEMB + F]
    user_ctx0 = feats[:, _C_UCTX0:_C_UCTX0 + F]
    user_ctx1 = feats[:, _C_UCTX1:_C_UCTX1 + F]
    item_emb = feats[:, _C_IEMB:_C_IEMB + F]
    item_bias = feats[:, _C_IBIAS:_C_IBIAS + 1]
    f0 = feats[:, _C_F0:_C_F0 + F]
    f1 = feats[:, _C_F1:_C_F1 + F]
    ctx_bias = feats[:, _C_CBIAS:_C_CBIAS + 1]

    pred = (jnp.sum(user_emb * item_emb + user_ctx0 * f0 + user_ctx1 * f1,
                    axis=-1, keepdims=True)
            + item_bias + ctx_bias)                                    # (2B, 1)
    out_ref[...] = pred


# --------------------- parameter packing (done once, off the hot path) --------
def pack_weight_slab(params):
    """Concatenate all embedding tables into one (72, 194) f32 weight slab."""
    f32 = jnp.float32
    w = jnp.zeros((K_HOT, N_FEAT), f32)

    # user rows
    w = w.at[0:USER_NUM, _C_UEMB:_C_UEMB + F].set(params["embed_user"].astype(f32))
    w = w.at[0:USER_NUM, _C_UCTX0:_C_UCTX0 + 2 * F].set(
        params["embed_user_context"].astype(f32))
    # item rows
    w = w.at[_K_ITEM:_K_ITEM + ITEM_NUM, _C_IEMB:_C_IEMB + F].set(
        params["embed_item"].astype(f32))
    w = w.at[_K_ITEM:_K_ITEM + ITEM_NUM, _C_IBIAS].set(
        params["bias_item"].astype(f32))
    # context field 0 (one-hot categorical): table rows [0:12)
    ctx_tab = params["embed_context_table"].astype(f32)   # (43, F), row 12 = padding
    bias_tab = params["context_bias_table"].astype(f32)   # (43, 1), row 12 = padding
    w = w.at[_K_CTX1:_K_CTX1 + D_ONEHOT, _C_F0:_C_F0 + F].set(ctx_tab[:D_ONEHOT])
    w = w.at[_K_CTX1:_K_CTX1 + D_ONEHOT, _C_CBIAS].set(bias_tab[:D_ONEHOT, 0])
    # context field 1 (multi-hot): table rows [13:43)  (row 12 padding skipped)
    w = w.at[_K_CTXM:K_HOT, _C_F1:_C_F1 + F].set(ctx_tab[D_ONEHOT + 1:])
    w = w.at[_K_CTXM:K_HOT, _C_CBIAS].set(bias_tab[D_ONEHOT + 1:, 0])
    return w


# ------------------------------- forward wrapper ------------------------------
@jax.jit
def contextual_bpr_forward(w_slab, user, item_i, item_j, context_i, context_j):
    """Pack the tiny per-batch operands into 2 slabs and run one pallas_call."""
    b = user.shape[0]
    f32 = jnp.float32

    # (2B, 3) int32: i rows stacked over j rows.
    ids = jnp.stack([
        jnp.concatenate([user, user]),
        jnp.concatenate([item_i, item_j]),
        jnp.concatenate([context_i[:, 0], context_j[:, 0]]),
    ], axis=1).astype(jnp.int32)

    # (2B, 72) f32: multi-hot (already cast from the != 0 test) placed at its
    # final column offset so the kernel just adds it to the one-hot block.
    multihot = jnp.concatenate(
        [(context_i[:, 1:] != 0), (context_j[:, 1:] != 0)], axis=0).astype(f32)
    multihot_padded = jnp.pad(multihot, ((0, 0), (_K_CTXM, 0)))

    out = pl.pallas_call(
        _cbpr_kernel,
        out_shape=jax.ShapeDtypeStruct((2 * b, 1), f32),
        in_specs=[pl.BlockSpec(memory_space=pltpu.MemorySpace.VMEM)] * 3,
        out_specs=pl.BlockSpec(memory_space=pltpu.MemorySpace.VMEM),
    )(ids, multihot_padded, w_slab)

    # TODO(synk): if BATCH ever grows to hundreds of rows, switch to a 1-D grid
    # over batch (weight slab index_map -> (0, 0), batch axis "parallel") and
    # cast the matmul operands to bf16 on v6e/v7x.
    return out[:b, 0], out[b:, 0]


# ------------------------- pure-JAX reference (for checking) ------------------
def _embedding_layer_ref(table, x):
    # table: (CONTEXT_NUM + 1, E); x: (B, 1 + D_MULTIHOT) int
    one_hot_x = x[:, :FIELD_NUM - 1]                                  # (B, 1)
    multi_hot_x = x[:, FIELD_NUM - 1:]                                # (B, 30)
    f0 = table[one_hot_x[:, 0] + OFFSETS[0]]                          # (B, E)
    cols = jnp.arange(1, D_MULTIHOT + 1)[None, :]                     # col index + 1
    idx = jnp.where(multi_hot_x != 0, cols + OFFSETS[-1], OFFSETS[-1])
    f1 = table[idx].sum(axis=1)                                       # (B, E)
    return jnp.stack([f0, f1], axis=1)                                # (B, 2, E)


def contextual_bpr_reference(params, user, item_i, item_j, context_i, context_j):
    ue = params["embed_user"][user]
    ii = params["embed_item"][item_i]
    ij = params["embed_item"][item_j]
    bi = params["bias_item"][item_i]
    bj = params["bias_item"][item_j]
    bpr_i = (ue * ii).sum(-1) + bi
    bpr_j = (ue * ij).sum(-1) + bj

    cb_i = _embedding_layer_ref(params["context_bias_table"], context_i).sum(axis=1)[:, 0]
    cb_j = _embedding_layer_ref(params["context_bias_table"], context_j).sum(axis=1)[:, 0]
    ce_i = _embedding_layer_ref(params["embed_context_table"], context_i).reshape(-1, TOTAL_EMBED_NUM)
    ce_j = _embedding_layer_ref(params["embed_context_table"], context_j).reshape(-1, TOTAL_EMBED_NUM)
    uc = params["embed_user_context"][user]
    cbpr_i = (uc * ce_i).sum(-1) + cb_i
    cbpr_j = (uc * ce_j).sum(-1) + cb_j
    return bpr_i + cbpr_i, bpr_j + cbpr_j


# ------------------------------- parameter init --------------------------------
def init_params(key):
    ks = jax.random.split(key, 5)
    f32 = jnp.float32
    embed_user = 0.01 * jax.random.normal(ks[0], (USER_NUM, FACTOR_NUM), f32)
    embed_item = 0.01 * jax.random.normal(ks[1], (ITEM_NUM, FACTOR_NUM), f32)
    bias_item = jnp.zeros((ITEM_NUM,), f32)
    embed_user_context = jax.random.normal(ks[2], (USER_NUM, TOTAL_EMBED_NUM), f32)

    # EmbeddingLayer tables: (CONTEXT_NUM + 1, E), padding_idx = OFFSETS[-1] = 12 -> zero row
    ctx_bias_tab = jax.random.normal(ks[3], (CONTEXT_NUM + 1, 1), f32)
    ctx_bias_tab = ctx_bias_tab.at[OFFSETS[-1]].set(0.0)
    ctx_emb_tab = jax.random.normal(ks[4], (CONTEXT_NUM + 1, FACTOR_NUM), f32)
    ctx_emb_tab = ctx_emb_tab.at[OFFSETS[-1]].set(0.0)

    return {
        "embed_user": embed_user,
        "embed_item": embed_item,
        "bias_item": bias_item,
        "embed_user_context": embed_user_context,
        "context_bias_table": ctx_bias_tab,
        "embed_context_table": ctx_emb_tab,
    }


if __name__ == "__main__":
    key = jax.random.PRNGKey(0)
    pkey, k_u, k_i, k_j, k_c1, k_c2, k_m1, k_m2 = jax.random.split(key, 8)
    params = init_params(pkey)
    w_slab = jax.block_until_ready(pack_weight_slab(params))   # packed once

    user = jax.random.randint(k_u, (BATCH,), 0, USER_NUM, dtype=jnp.int32)
    item_i = jax.random.randint(k_i, (BATCH,), 0, ITEM_NUM, dtype=jnp.int32)
    item_j = jax.random.randint(k_j, (BATCH,), 0, ITEM_NUM, dtype=jnp.int32)

    # context = [categorical id in [0, 12)] ++ [30-dim 0/1 multi-hot vector]
    ctx_i_first = jax.random.randint(k_c1, (BATCH, 1), 0, D_ONEHOT, dtype=jnp.int32)
    ctx_j_first = jax.random.randint(k_c2, (BATCH, 1), 0, D_ONEHOT, dtype=jnp.int32)
    ctx_i_multi = jax.random.bernoulli(k_m1, 0.3, (BATCH, D_MULTIHOT)).astype(jnp.int32)
    ctx_j_multi = jax.random.bernoulli(k_m2, 0.3, (BATCH, D_MULTIHOT)).astype(jnp.int32)
    context_i = jnp.concatenate([ctx_i_first, ctx_i_multi], axis=1)   # (B, 31)
    context_j = jnp.concatenate([ctx_j_first, ctx_j_multi], axis=1)   # (B, 31)

    pred_i, pred_j = contextual_bpr_forward(w_slab, user, item_i, item_j,
                                            context_i, context_j)
    pred_i = jax.block_until_ready(pred_i)
    pred_j = jax.block_until_ready(pred_j)

    ref_i, ref_j = contextual_bpr_reference(params, user, item_i, item_j,
                                            context_i, context_j)
    np.testing.assert_allclose(np.asarray(pred_i), np.asarray(ref_i), rtol=1e-4, atol=1e-4)
    np.testing.assert_allclose(np.asarray(pred_j), np.asarray(ref_j), rtol=1e-4, atol=1e-4)

    print("KERNEL_OK")
</pallas_src>

<mosaic_0001>
module attributes {stable_mosaic.version = 11 : i64} {
  func.func @_cbpr_kernel(%arg0: memref<16x3xi32, #tpu.memory_space<vmem>>, %arg1: memref<16x72xf32, #tpu.memory_space<vmem>>, %arg2: memref<72x194xf32, #tpu.memory_space<vmem>>, %arg3: memref<16x1xf32, #tpu.memory_space<vmem>>) attributes {dimension_semantics = [], scalar_prefetch = 0 : i64, scratch_operands = 0 : i64, tpu.core_type = #tpu.core_type<tc>} {
    %c0 = arith.constant 0 : index
    %c0_0 = arith.constant 0 : index
    %0 = vector.load %arg0[%c0, %c0_0] : memref<16x3xi32, #tpu.memory_space<vmem>>, vector<16x3xi32>
    %1 = vector.extract_strided_slice %0 {offsets = [0, 0], sizes = [16, 1], strides = [1, 1]} : vector<16x3xi32> to vector<16x1xi32>
    %2 = vector.extract_strided_slice %0 {offsets = [0, 1], sizes = [16, 1], strides = [1, 1]} : vector<16x3xi32> to vector<16x1xi32>
    %3 = vector.extract_strided_slice %0 {offsets = [0, 2], sizes = [16, 1], strides = [1, 1]} : vector<16x3xi32> to vector<16x1xi32>
    %4 = tpu.iota {dimensions = array<i32: 1>} : vector<16x72xi32>
    %5 = vector.broadcast %1 : vector<16x1xi32> to vector<16x72xi32>
    %6 = arith.cmpi eq, %4, %5 : vector<16x72xi32>
    %c10_i32 = arith.constant 10 : i32
    %7 = vector.broadcast %c10_i32 : i32 to vector<16x1xi32>
    %8 = arith.addi %2, %7 : vector<16x1xi32>
    %9 = vector.broadcast %8 : vector<16x1xi32> to vector<16x72xi32>
    %10 = arith.cmpi eq, %4, %9 : vector<16x72xi32>
    %11 = arith.ori %6, %10 : vector<16x72xi1>
    %c30_i32 = arith.constant 30 : i32
    %12 = vector.broadcast %c30_i32 : i32 to vector<16x1xi32>
    %13 = arith.addi %3, %12 : vector<16x1xi32>
    %14 = vector.broadcast %13 : vector<16x1xi32> to vector<16x72xi32>
    %15 = arith.cmpi eq, %4, %14 : vector<16x72xi32>
    %16 = arith.ori %11, %15 : vector<16x72xi1>
    %17 = arith.extui %16 : vector<16x72xi1> to vector<16x72xi32>
    %18 = arith.sitofp %17 : vector<16x72xi32> to vector<16x72xf32>
    %c0_1 = arith.constant 0 : index
    %c0_2 = arith.constant 0 : index
    %19 = vector.load %arg1[%c0_1, %c0_2] : memref<16x72xf32, #tpu.memory_space<vmem>>, vector<16x72xf32>
    %20 = arith.addf %18, %19 : vector<16x72xf32>
    %c0_3 = arith.constant 0 : index
    %c0_4 = arith.constant 0 : index
    %21 = vector.load %arg2[%c0_3, %c0_4] : memref<72x194xf32, #tpu.memory_space<vmem>>, vector<72x194xf32>
    %cst = arith.constant dense<0.000000e+00> : vector<16x194xf32>
    %22 = tpu.matmul %20, %21, %cst {dimension_numbers = #tpu.dot_dimension_numbers<[1], [0], [0], [1], [0, 0, 1, 1], [], []>} : vector<16x72xf32>, vector<72x194xf32>, vector<16x194xf32> -> vector<16x194xf32>
    %23 = vector.extract_strided_slice %22 {offsets = [0, 0], sizes = [16, 32], strides = [1, 1]} : vector<16x194xf32> to vector<16x32xf32>
    %24 = vector.extract_strided_slice %22 {offsets = [0, 32], sizes = [16, 32], strides = [1, 1]} : vector<16x194xf32> to vector<16x32xf32>
    %25 = vector.extract_strided_slice %22 {offsets = [0, 64], sizes = [16, 32], strides = [1, 1]} : vector<16x194xf32> to vector<16x32xf32>
    %26 = vector.extract_strided_slice %22 {offsets = [0, 96], sizes = [16, 32], strides = [1, 1]} : vector<16x194xf32> to vector<16x32xf32>
    %27 = vector.extract_strided_slice %22 {offsets = [0, 128], sizes = [16, 1], strides = [1, 1]} : vector<16x194xf32> to vector<16x1xf32>
    %28 = vector.extract_strided_slice %22 {offsets = [0, 129], sizes = [16, 32], strides = [1, 1]} : vector<16x194xf32> to vector<16x32xf32>
    %29 = vector.extract_strided_slice %22 {offsets = [0, 161], sizes = [16, 32], strides = [1, 1]} : vector<16x194xf32> to vector<16x32xf32>
    %30 = vector.extract_strided_slice %22 {offsets = [0, 193], sizes = [16, 1], strides = [1, 1]} : vector<16x194xf32> to vector<16x1xf32>
    %31 = arith.mulf %23, %26 : vector<16x32xf32>
    %32 = arith.mulf %24, %28 : vector<16x32xf32>
    %33 = arith.addf %31, %32 : vector<16x32xf32>
    %34 = arith.mulf %25, %29 : vector<16x32xf32>
    %35 = arith.addf %33, %34 : vector<16x32xf32>
    %cst_5 = arith.constant dense<0.000000e+00> : vector<16xf32>
    %36 = vector.multi_reduction <add>, %35, %cst_5 [1] : vector<16x32xf32> to vector<16xf32>
    %37 = vector.shape_cast %36 : vector<16xf32> to vector<16x1xf32>
    %38 = arith.addf %37, %27 : vector<16x1xf32>
    %39 = arith.addf %38, %30 : vector<16x1xf32>
    %c0_6 = arith.constant 0 : index
    %c0_7 = arith.constant 0 : index
    %40 = vector.load %arg3[%c0_6, %c0_7] : memref<16x1xf32, #tpu.memory_space<vmem>>, vector<16x1xf32>
    tpu.vector_store %arg3[%c0_6, %c0_7], %39 {strides = array<i32>} : memref<16x1xf32, #tpu.memory_space<vmem>>, vector<16x1xf32>,
    return
  }
}

</mosaic_0001>

<llo_original>
// kernel: contextual_bpr_forward.1
$region0: #{contextual_bpr_forward.1}
  #allocation0 [shape = 'u32[]', space=smem, size = 0x4, offset = 0x4, fixed_abs, tag = 'smem constant byte address 0x4 - core index']
  #allocation1 [shape = 'u32[144,128]{1,0:T(1,128)}', space=vmem, size = 0x12000, scoped, tag = 'internal scratch']
  %s0 = inlined_call_operand.vmem [shape: s32[16,3], index: 0, kind: input, shape index: {}]
  %s1 = inlined_call_operand.vmem [shape: f32[16,72], index: 1, kind: input, shape index: {}]
  %s2 = inlined_call_operand.hbm [shape: f32[72,194], index: 2, kind: input, shape index: {}]
  %s3 = inlined_call_operand.vmem [shape: f32[16,1], index: 3, kind: output, shape index: {}]
  %s4 = sld [smem:[#allocation0]]
  $region26: #{contextual_bpr_forward.1} parent=0
    _
  %s6 = ssub.s32 1, %s4
  %s7 = scalar_select 0, %s6, %s4
  $region1: #{contextual_bpr_forward.1} parent=0
    #allocation2 [shape = 'u8[73728]{0}', space=vmem, size = 0x12000, scoped, tag = 'input window, operand 2, single buffered']
    #allocation3 [shape = 's32[1]{0}', space=sflag, size = 0x4, scoped, tag = 'scoped memory for contextual_bpr_forward.1']
    %8 = vsyncpa [#allocation3], 0
    // Predicated region
    $region2: #{contextual_bpr_forward.1} parent=1 // pred_check
      _
    $region3: #{contextual_bpr_forward.1} parent=1 // pred_check_branch
      %10 = sbr.rel (0) target = $region5
    $region4: #{contextual_bpr_forward.1} parent=1 // pred_region
      _
    $region5: #{contextual_bpr_forward.1} parent=1 // pred_fallthru
      _
    // Predicated region
    $region6: #{contextual_bpr_forward.1} parent=1 // pred_check
      _
    $region7: #{contextual_bpr_forward.1} parent=1 // pred_check_branch
      %12 = sbr.rel (0) target = $region9
    $region8: #{contextual_bpr_forward.1} parent=1 // pred_region
      _
    $region9: #{contextual_bpr_forward.1} parent=1 // pred_fallthru
      _
    // Predicated region
    $region10: #{contextual_bpr_forward.1} parent=1 // pred_check
      _
    $region11: #{contextual_bpr_forward.1} parent=1 // pred_check_branch
      %14 = sbr.rel (0) target = $region13
    $region12: #{contextual_bpr_forward.1} parent=1 // pred_region
      %s16 = ssub.s32 2304, 2304
      %17 = vsyncadd [#allocation3], %s16
      %s18 = sshll.u32 [#allocation2], 4
      %s19 = int_to_ptr.vmem [resolvable:$true] %s18
      %24 = dma.hbm_to_vmem [thread:$0]  %s2, 2304, %s19, [#allocation3], 256, 256, 16
    $region13: #{contextual_bpr_forward.1} parent=1 // pred_fallthru
      _
    // Predicated region
    $region14: #{contextual_bpr_forward.1} parent=1 // pred_check
      _
    $region15: #{contextual_bpr_forward.1} parent=1 // pred_check_branch
      %26 = sbr.rel (0) target = $region17
    $region16: #{contextual_bpr_forward.1} parent=1 // pred_region
      %27 = dma.done [#allocation3], 2304
    $region17: #{contextual_bpr_forward.1} parent=1 // pred_fallthru
      _
    %v28 = vld [vmem:[%s0] sm:$0xff]
    %v29 = vld [vmem:[%s0 + $0x8] sm:$0xff]
    %v30 = vlaneseq
    %v31 = vand.u32 %v30, 127
    %32 = vset.pattern.permute.xlu0 0
    %33 = vperm.xlu0 %32, %v28
    %v34 = vpop.permute.xlu0 %33
    %35 = vset.pattern.permute.xlu0 0
    %36 = vperm.xlu0 %35, %v29
    %v37 = vpop.permute.xlu0 %36
    %vm38 = vcmp.eq.s32.totalorder %v31, %v34
    %vm39 = vcmp.eq.s32.totalorder %v31, %v37
    %v40 = vadd.s32 %v28, 10
    %v41 = vadd.s32 %v29, 10
    %42 = vset.pattern.permute.xlu0 1
    %43 = vperm.xlu0 %42, %v40
    %v44 = vpop.permute.xlu0 %43
    %45 = vset.pattern.permute.xlu0 1
    %46 = vperm.xlu0 %45, %v41
    %v47 = vpop.permute.xlu0 %46
    %vm48 = vcmp.eq.s32.totalorder %v31, %v44
    %vm49 = vcmp.eq.s32.totalorder %v31, %v47
    %vm50 = vmor %vm38, %vm48
    %vm51 = vmor %vm39, %vm49
    %v52 = vadd.s32 %v28, 30
    %v53 = vadd.s32 %v29, 30
    %54 = vset.pattern.permute.xlu0 2
    %55 = vperm.xlu0 %54, %v52
    %v56 = vpop.permute.xlu0 %55
    %57 = vset.pattern.permute.xlu0 2
    %58 = vperm.xlu0 %57, %v53
    %v59 = vpop.permute.xlu0 %58
    %vm60 = vcmp.eq.s32.totalorder %v31, %v56
    %vm61 = vcmp.eq.s32.totalorder %v31, %v59
    %vm62 = vmor %vm50, %vm60
    %vm63 = vmor %vm51, %vm61
    %v64 = vsel %vm62, 1, 0
    %v65 = vsel %vm63, 1, 0
    %v66 = vcvt.s32.f32 %v64
    %v67 = vcvt.s32.f32 %v65
    %v68 = vld [vmem:[%s1] sm:$0xff]
    %v69 = vld [vmem:[%s1 + $0x8] sm:$0xff]
    %v70 = vadd.f32 %v66, %v68
    %v71 = vadd.f32 %v67, %v69
    %v72 = vld [vmem:[#allocation2] sm:$0xff]
    %v73 = vld [vmem:[#allocation2 + $0x8] sm:$0xff]
    %v74 = vld [vmem:[#allocation2 + $0x10] sm:$0xff]
    %v75 = vld [vmem:[#allocation2 + $0x18] sm:$0xff]
    %v76 = vld [vmem:[#allocation2 + $0x20] sm:$0xff]
    %v77 = vld [vmem:[#allocation2 + $0x28] sm:$0xff]
    %v78 = vld [vmem:[#allocation2 + $0x30] sm:$0xff]
    %v79 = vld [vmem:[#allocation2 + $0x38] sm:$0xff]
    %v80 = vld [vmem:[#allocation2 + $0x40] sm:$0xff]
    %v81 = vld [vmem:[#allocation2 + $0x48] sm:$0xff]
    %v82 = vld [vmem:[#allocation2 + $0x50] sm:$0xff]
    %v83 = vld [vmem:[#allocation2 + $0x58] sm:$0xff]
    %v84 = vld [vmem:[#allocation2 + $0x60] sm:$0xff]
    %v85 = vld [vmem:[#allocation2 + $0x68] sm:$0xff]
    %v86 = vld [vmem:[#allocation2 + $0x70] sm:$0xff]
    %v87 = vld [vmem:[#allocation2 + $0x78] sm:$0xff]
    %v88 = vld [vmem:[#allocation2 + $0x80] sm:$0xff]
    %v89 = vld [vmem:[#allocation2 + $0x88] sm:$0xff]
    %vm90 = vcmask 588800
    %v92 = vsel %vm90, %v70, 0
    %v95 = vsel %vm90, %v71, 0
    %97 = vmatprep.subr.mxu0 %v73
    %98 = vmatpush1.msra.mxu0 %v72
    %99 = vmatprep.subr.mxu0 %v75
    %100 = vmatpush1.msra.mxu0 %v74
    %101 = vmatprep.subr.mxu0 %v77
    %102 = vmatpush1.msra.mxu0 %v76
    %103 = vmatprep.subr.mxu0 %v79
    %104 = vmatpush1.msra.mxu0 %v78
    %105 = vmatprep.subr.mxu0 %v81
    %106 = vmatpush1.msra.mxu0 %v80
    %107 = vmatprep.subr.mxu0 %v83
    %108 = vmatpush1.msra.mxu0 %v82
    %109 = vmatprep.subr.mxu0 %v85
    %110 = vmatpush1.msra.mxu0 %v84
    %111 = vmatprep.subr.mxu0 %v87
    %112 = vmatpush1.msra.mxu0 %v86
    %113 = vmatprep.subr.mxu0 %v89
    %114 = vmatpush1.msra.mxu0 %v88
    %115 = vmatprep.subr.mxu0 0.0
    %116 = vmatpush1.msra.mxu0 0.0
    %117 = vmatprep.subr.mxu0 0.0
    %118 = vmatpush1.msra.mxu0 0.0
    %119 = vmatprep.subr.mxu0 0.0
    %120 = vmatpush1.msra.mxu0 0.0
    %121 = vmatprep.subr.mxu0 0.0
    %122 = vmatpush1.msra.mxu0 0.0
    %123 = vmatprep.subr.mxu0 0.0
    %124 = vmatpush1.msra.mxu0 0.0
    %125 = vmatprep.subr.mxu0 0.0
    %126 = vmatpush1.msra.mxu0 0.0
    %127 = vmatprep.subr.mxu0 0.0
    %128 = vmatpush1.msra.mxu0 0.0
    %129 = vmatprep.subr.mxu0 0.0
    %130 = vmatpush1.msra.mxu0 0.0
    %131 = vmatprep.subr.mxu0 0.0
    %132 = vmatpush1.msra.mxu0 0.0
    %133 = vmatprep.subr.mxu0 0.0
    %134 = vmatpush1.msra.mxu0 0.0
    %135 = vmatprep.subr.mxu0 0.0
    %136 = vmatpush1.msra.mxu0 0.0
    %137 = vmatprep.subr.mxu0 0.0
    %138 = vmatpush1.msra.mxu0 0.0
    %139 = vmatprep.subr.mxu0 0.0
    %140 = vmatpush1.msra.mxu0 0.0
    %141 = vmatprep.subr.mxu0 0.0
    %142 = vmatpush1.msra.mxu0 0.0
    %143 = vmatprep.subr.mxu0 0.0
    %144 = vmatpush1.msra.mxu0 0.0
    %145 = vmatprep.subr.mxu0 0.0
    %146 = vmatpush1.msra.mxu0 0.0
    %147 = vmatprep.subr.mxu0 0.0
    %148 = vmatpush1.msra.mxu0 0.0
    %149 = vmatprep.subr.mxu0 0.0
    %150 = vmatpush1.msra.mxu0 0.0
    %151 = vmatprep.subr.mxu0 0.0
    %152 = vmatpush1.msra.mxu0 0.0
    %153 = vmatprep.subr.mxu0 0.0
    %154 = vmatpush1.msra.mxu0 0.0
    %155 = vmatprep.subr.mxu0 0.0
    %156 = vmatpush1.msra.mxu0 0.0
    %157 = vmatprep.subr.mxu0 0.0
    %158 = vmatpush1.msra.mxu0 0.0
    %159 = vmatprep.subr.mxu0 0.0
    %160 = vmatpush1.msra.mxu0 0.0
    %161 = vmatprep.mubr.f32.mxu0 0.0
    %162 = vmatmul.mubr.f32.gmra.mrb[0].mxu0 %v92
    %v163 = vpop.f32.mrb[0].mxu0
    %v164 = vadd.f32 0.0, %v163
    %v165 = vpop.f32.mrb[0].mxu0
    %v166 = vadd.f32 0.0, %v165
    %167 = vmatprep.mubr.f32.mxu0 0.0
    %168 = vmatmul.mubr.f32.gmra.mrb[0].mxu0 %v95
    %v169 = vpop.f32.mrb[0].mxu0
    %v170 = vadd.f32 0.0, %v169
    %v171 = vpop.f32.mrb[0].mxu0
    %v172 = vadd.f32 0.0, %v171
    %173 = vdwg.mxu0
    %176 = vrot.lane.b32.xlu0 %v164, 32
    %v177 = vpop.permute.xlu0 %176
    %178 = vrot.lane.b32.xlu0 %v170, 32
    %v179 = vpop.permute.xlu0 %178
    %v182 = vmul.f32 %v164, %v177
    %v183 = vmul.f32 %v170, %v179
    %186 = vrot.lane.b32.xlu0 %v166, 31
    %v187 = vpop.permute.xlu0 %186
    %188 = vrot.lane.b32.xlu0 %v172, 31
    %v189 = vpop.permute.xlu0 %188
    %v192 = vmul.f32 %v164, %v187
    %v193 = vmul.f32 %v170, %v189
    %196 = vrot.lane.b32.xlu0 %v192, 96
    %v197 = vpop.permute.xlu0 %196
    %198 = vrot.lane.b32.xlu0 %v193, 96
    %v199 = vpop.permute.xlu0 %198
    %v202 = vadd.f32 %v182, %v197
    %v203 = vadd.f32 %v183, %v199
    %204 = vrot.lane.b32.xlu0 %v192, 64
    %v205 = vpop.permute.xlu0 %204
    %206 = vrot.lane.b32.xlu0 %v193, 64
    %v207 = vpop.permute.xlu0 %206
    %v210 = vadd.f32 %v202, %v205
    %v211 = vadd.f32 %v203, %v207
    %vm212 = vcmask 261120
    %v213 = vsel %vm212, %v210, 0.0
    %214 = vadd.xlane.f32.xlu0 %v213
    %v215 = vpop.xlane.xlu0 %214
    %v216 = vsel %vm212, %v211, 0.0
    %217 = vadd.xlane.f32.xlu0 %v216
    %v218 = vpop.xlane.xlu0 %217
    %v219 = vadd.f32 %v215, %v166
    %v220 = vadd.f32 %v218, %v172
    %221 = vrot.lane.b32.xlu0 %v166, 63
    %v222 = vpop.permute.xlu0 %221
    %223 = vrot.lane.b32.xlu0 %v172, 63
    %v224 = vpop.permute.xlu0 %223
    %v227 = vadd.f32 %v219, %v222
    %v228 = vadd.f32 %v220, %v224
    %vm229 = vcmask 7168
    %230 = vst.msk [vmem:[%s3] sm:$0xff] %vm229, %v227
    %231 = vst.msk [vmem:[%s3 + $0x8] sm:$0xff] %vm229, %v228
    // Predicated region
    $region18: #{contextual_bpr_forward.1} parent=1 // pred_check
      _
    $region19: #{contextual_bpr_forward.1} parent=1 // pred_check_branch
      %233 = sbr.rel (0) target = $region21
    $region20: #{contextual_bpr_forward.1} parent=1 // pred_region
      _
    $region21: #{contextual_bpr_forward.1} parent=1 // pred_fallthru
      _
    // Predicated region
    $region22: #{contextual_bpr_forward.1} parent=1 // pred_check
      _
    $region23: #{contextual_bpr_forward.1} parent=1 // pred_check_branch
      %235 = sbr.rel (0) target = $region25
    $region24: #{contextual_bpr_forward.1} parent=1 // pred_region
      _
    $region25: #{contextual_bpr_forward.1} parent=1 // pred_fallthru
      _
    %236 = vsyncpa [#allocation3], 1

</llo_original>
